<compile_context>
chip_gen: v6e
topology: v6e:2x2x1
jax: 0.10.0
libtpu: 0.0.40
codegen_flags: <defaults>
</compile_context>

<pallas_src>
import jax
import jax.numpy as jnp
import numpy as np
from jax.experimental import pallas as pl
from jax.experimental.pallas import tpu as pltpu


def _round_up(x, m):
    return ((x + m - 1) // m) * m


def _tensorcores_per_device():
    """Best-effort TensorCore-per-chip count (megacore gating). Defaults to 1."""
    try:
        d = jax.devices()[0]
        nc = getattr(d, "num_cores", None)
        if isinstance(nc, int) and nc > 0:
            return nc
        kind = str(getattr(d, "device_kind", "")).lower()
        if ("v4" in kind) or ("v5p" in kind) or ("v7" in kind):
            return 2
    except Exception:
        pass
    return 1


def _make_fused_1x1_mlp_kernel(chunk, n_chunks):
    """Fused (1x1 conv -> ReLU -> 1x1 conv) over one (C_in, Tpx) pixel tile.

    The pixel tile is processed in `chunk`-lane sub-chunks so the (hidden, chunk)
    f32 intermediate stays in vregs (no VMEM round-trip of h).
    """

    def kernel(x_ref, w1_ref, b1_ref, w2_ref, b2_ref, o_ref):
        # x_ref : (C_in, Tpx)     w1_ref: (hidden, C_in)   b1_ref: (hidden, 1)
        # w2_ref: (1, hidden)     b2_ref: (1, 1)           o_ref : (1, Tpx)
        w1 = w1_ref[...]
        b1 = b1_ref[...]
        w2 = w2_ref[...].astype(jnp.float32)
        b2 = b2_ref[...]

        def compute_chunk(off):
            xt = x_ref[:, pl.ds(off, chunk)]                       # (C_in, chunk)
            h = jnp.dot(w1, xt, preferred_element_type=jnp.float32)
            h = jnp.maximum(h + b1, 0.0)                           # bias + ReLU (f32, VPU)
            o = jnp.dot(w2, h, preferred_element_type=jnp.float32)  # (1, chunk)
            o_ref[:, pl.ds(off, chunk)] = (o + b2).astype(o_ref.dtype)

        if n_chunks == 1:
            compute_chunk(0)
        else:
            def body(c, carry):
                compute_chunk(pl.multiple_of(c * chunk, chunk))
                return carry
            jax.lax.fori_loop(0, n_chunks, body, 0, unroll=min(4, n_chunks))

    return kernel


def linear_projection_layers(x_nchw, w1, b1, w2, b2, *, tile_px=32768):
    """Pallas implementation of LinearProjectionLayers.forward (conv branch).

    x_nchw : (N, C_in, H, W)
    w1     : (hidden, C_in)   -- torch conv1 weight (hidden, C_in, 1, 1) squeezed
    b1     : (hidden,)
    w2     : (1, hidden)      -- torch conv2 weight (1, hidden, 1, 1) squeezed
    b2     : (1,)
    returns: (N, 1, H, W), same dtype as x
    """
    N, C_in, H, W = x_nchw.shape
    hidden = w1.shape[0]
    P = H * W

    # Pixels padded only to a multiple of 128 (no-op when already aligned).
    P_pad = _round_up(P, 128)

    # NCHW -> (N, C_in, P) is a free view (no HBM copy).
    x_cp = x_nchw.reshape(N, C_in, P)
    if P_pad != P:
        # Rare ragged case: <=127 extra zero columns (small, vs. tile-sized pad).
        x_cp = jnp.pad(x_cp, ((0, 0), (0, 0), (0, P_pad - P)))

    # Lane tile: big (amortize ~0.35us/step), multiple of 128, capped by extent.
    tpx = min(_round_up(tile_px, 128), P_pad)
    # Split a single-tile problem only when there are >=2 TensorCores to feed.
    if (_tensorcores_per_device() >= 2 and P_pad > 128
            and N * pl.cdiv(P_pad, tpx) < 2):
        tpx = _round_up(pl.cdiv(P_pad, 2), 128)
    num_px_tiles = pl.cdiv(P_pad, tpx)   # last tile may be ragged (writes masked)

    # In-kernel sub-chunk: keeps the (hidden, chunk) f32 intermediate in vregs.
    chunk = 512
    while tpx % chunk:
        chunk //= 2                      # tpx is a multiple of 128, so this terminates
    n_chunks = tpx // chunk

    b1_col = b1.reshape(hidden, 1).astype(jnp.float32)   # sublane-broadcast bias
    b2_2d = b2.reshape(1, 1).astype(jnp.float32)

    itemsize = jnp.dtype(x_cp.dtype).itemsize
    # Double-buffered input/output blocks + tiny constants + vreg-ish h chunk.
    vmem_est = (2 * C_in * tpx * itemsize
                + 2 * 1 * tpx * itemsize
                + 2 * (hidden * C_in + hidden + hidden + 1) * 4
                + hidden * chunk * 4)
    compiler_kwargs = dict(dimension_semantics=("parallel", "parallel"))
    if vmem_est > 12 * (1 << 20):        # only raise above the smallest default (v5e)
        compiler_kwargs["vmem_limit_bytes"] = int(min(2 * vmem_est, 48 * (1 << 20)))

    cost = pl.CostEstimate(
        flops=int(2 * N * P_pad * hidden * (C_in + 1)),
        transcendentals=0,
        bytes_accessed=int(N * P_pad * (C_in + 1) * itemsize
                           + (hidden * C_in + hidden + hidden + 1) * 4),
    )

    out = pl.pallas_call(
        _make_fused_1x1_mlp_kernel(chunk, n_chunks),
        out_shape=jax.ShapeDtypeStruct((N, 1, P_pad), x_nchw.dtype),
        grid_spec=pltpu.PrefetchScalarGridSpec(
            num_scalar_prefetch=0,
            grid=(N, num_px_tiles),
            in_specs=[
                # activation tile: channels on sublanes, pixels on lanes
                pl.BlockSpec((None, C_in, tpx), lambda n, p: (n, 0, p)),
                # small constant operands, kept whole every step
                pl.BlockSpec((hidden, C_in), lambda n, p: (0, 0)),
                pl.BlockSpec((hidden, 1), lambda n, p: (0, 0)),
                pl.BlockSpec((1, hidden), lambda n, p: (0, 0)),
                pl.BlockSpec((1, 1), lambda n, p: (0, 0)),
            ],
            # lane-dense output block (1, Tpx): wide unmasked lane stores
            out_specs=pl.BlockSpec((None, 1, tpx), lambda n, p: (n, 0, p)),
        ),
        compiler_params=pltpu.CompilerParams(**compiler_kwargs),
        cost_estimate=cost,
    )(x_cp, w1, b1_col, w2, b2_2d)

    # (N, 1, P_pad) -> drop pad -> (N, 1, H, W)   (free views / cheap slice)
    return out[:, :, :P].reshape(N, 1, H, W)


def _xavier_uniform(key, fan_in, fan_out, shape):
    # matches torch.nn.init.xavier_uniform_ semantics (gain=1)
    limit = float(np.sqrt(6.0 / (fan_in + fan_out)))
    return jax.random.uniform(key, shape, jnp.float32, -limit, limit)


if __name__ == "__main__":
    # Small shapes consistent with the module's __init__:
    #   image_channels=4, rnn_hidden_size=8  -> C_in = 12
    #   linear_hidden_size=32, num_hidden_layers=1 (conv branch)
    #   batch=2, spatial 16x16
    N, H, W = 2, 16, 16
    image_channels, rnn_hidden_size, linear_hidden_size = 4, 8, 32
    C_in = image_channels + rnn_hidden_size

    key = jax.random.PRNGKey(0)
    kx, k1, k2 = jax.random.split(key, 3)

    x = jax.random.normal(kx, (N, C_in, H, W), jnp.float32)

    # Conv2d(C_in, hidden, 1): weight (hidden, C_in, 1, 1) xavier_uniform, bias = 0.01
    w1 = _xavier_uniform(k1, fan_in=C_in, fan_out=linear_hidden_size,
                         shape=(linear_hidden_size, C_in))             # (hidden, C_in)
    b1 = jnp.full((linear_hidden_size,), 0.01, jnp.float32)
    # Conv2d(hidden, 1, 1): weight (1, hidden, 1, 1) xavier_uniform, bias = 0.01
    w2 = _xavier_uniform(k2, fan_in=linear_hidden_size, fan_out=1,
                         shape=(1, linear_hidden_size))                # (1, hidden)
    b2 = jnp.full((1,), 0.01, jnp.float32)

    out = jax.block_until_ready(linear_projection_layers(x, w1, b1, w2, b2))

    # Pure-JAX reference (same math) for a correctness check.
    x_rows = jnp.transpose(x, (0, 2, 3, 1)).reshape(-1, C_in)
    ref_rows = jnp.maximum(x_rows @ w1.T + b1, 0.0) @ w2.T + b2
    ref = jnp.transpose(ref_rows.reshape(N, H, W, 1), (0, 3, 1, 2))
    np.testing.assert_allclose(np.asarray(out), np.asarray(ref),
                               rtol=1e-5, atol=1e-5)
    assert out.shape == (N, 1, H, W)

    # NOTE: inputs could be streamed as bf16 (f32 accumulation kept) for ~2x less
    # HBM traffic if the caller's numerics allow; left at f32 to match PyTorch.
    # TODO(synk): the num_hidden_layers == 0 branch (bias-free nn.Linear over the
    # channel axis) is a plain matmul and not implemented here; the conv branch is.
    print("KERNEL_OK")
</pallas_src>

<mosaic_0001>
module attributes {stable_mosaic.version = 11 : i64} {
  func.func @kernel(%arg0: i32, %arg1: i32, %arg2: memref<1x12x256xf32, #tpu.memory_space<vmem>>, %arg3: memref<32x12xf32, #tpu.memory_space<vmem>>, %arg4: memref<32x1xf32, #tpu.memory_space<vmem>>, %arg5: memref<1x32xf32, #tpu.memory_space<vmem>>, %arg6: memref<1x1xf32, #tpu.memory_space<vmem>>, %arg7: memref<1x1x256xf32, #tpu.memory_space<vmem>>) attributes {dimension_semantics = [#tpu.dimension_semantics<parallel>, #tpu.dimension_semantics<parallel>], iteration_bounds = array<i64: 2, 1>, scalar_prefetch = 0 : i64, scratch_operands = 0 : i64, tpu.core_type = #tpu.core_type<tc>, window_params = [{transform_indices = @transform_0, window_bounds = array<i64: 1, 12, 256>}, {pipeline_mode = #tpu.pipeline_mode<synchronous>, transform_indices = @transform_1, window_bounds = array<i64: 32, 12>}, {pipeline_mode = #tpu.pipeline_mode<synchronous>, transform_indices = @transform_2, window_bounds = array<i64: 32, 1>}, {pipeline_mode = #tpu.pipeline_mode<synchronous>, transform_indices = @transform_3, window_bounds = array<i64: 1, 32>}, {pipeline_mode = #tpu.pipeline_mode<synchronous>, transform_indices = @transform_4, window_bounds = array<i64: 1, 1>}, {transform_indices = @transform_5, window_bounds = array<i64: 1, 1, 256>}]} {
    %c0 = arith.constant 0 : index
    %c0_0 = arith.constant 0 : index
    %0 = vector.load %arg3[%c0, %c0_0] : memref<32x12xf32, #tpu.memory_space<vmem>>, vector<32x12xf32>
    %c0_1 = arith.constant 0 : index
    %c0_2 = arith.constant 0 : index
    %1 = vector.load %arg4[%c0_1, %c0_2] : memref<32x1xf32, #tpu.memory_space<vmem>>, vector<32x1xf32>
    %c0_3 = arith.constant 0 : index
    %c0_4 = arith.constant 0 : index
    %2 = vector.load %arg5[%c0_3, %c0_4] : memref<1x32xf32, #tpu.memory_space<vmem>>, vector<1x32xf32>
    %c0_5 = arith.constant 0 : index
    %c0_6 = arith.constant 0 : index
    %3 = vector.load %arg6[%c0_5, %c0_6] : memref<1x1xf32, #tpu.memory_space<vmem>>, vector<1x1xf32>
    %c0_7 = arith.constant 0 : index
    %c0_8 = arith.constant 0 : index
    %c0_9 = arith.constant 0 : index
    %4 = vector.load %arg2[%c0_7, %c0_8, %c0_9] : memref<1x12x256xf32, #tpu.memory_space<vmem>>, vector<1x12x256xf32>
    %5 = vector.shape_cast %4 : vector<1x12x256xf32> to vector<12x256xf32>
    %cst = arith.constant dense<0.000000e+00> : vector<32x256xf32>
    %6 = tpu.matmul %0, %5, %cst {dimension_numbers = #tpu.dot_dimension_numbers<[1], [0], [0], [1], [0, 0, 1, 1], [], []>} : vector<32x12xf32>, vector<12x256xf32>, vector<32x256xf32> -> vector<32x256xf32>
    %7 = vector.broadcast %1 : vector<32x1xf32> to vector<32x256xf32>
    %8 = arith.addf %6, %7 : vector<32x256xf32>
    %cst_10 = arith.constant 0.000000e+00 : f32
    %9 = vector.broadcast %cst_10 : f32 to vector<32x256xf32>
    %10 = arith.maximumf %8, %9 : vector<32x256xf32>
    %cst_11 = arith.constant dense<0.000000e+00> : vector<1x256xf32>
    %11 = tpu.matmul %2, %10, %cst_11 {dimension_numbers = #tpu.dot_dimension_numbers<[1], [0], [0], [1], [0, 0, 1, 1], [], []>} : vector<1x32xf32>, vector<32x256xf32>, vector<1x256xf32> -> vector<1x256xf32>
    %12 = vector.broadcast %3 : vector<1x1xf32> to vector<1x256xf32>
    %13 = arith.addf %11, %12 : vector<1x256xf32>
    %c0_12 = arith.constant 0 : index
    %c0_13 = arith.constant 0 : index
    %c0_14 = arith.constant 0 : index
    %14 = vector.load %arg7[%c0_12, %c0_13, %c0_14] : memref<1x1x256xf32, #tpu.memory_space<vmem>>, vector<1x1x256xf32>
    %15 = vector.shape_cast %14 : vector<1x1x256xf32> to vector<1x256xf32>
    %16 = vector.shape_cast %13 : vector<1x256xf32> to vector<1x1x256xf32>
    tpu.vector_store %arg7[%c0_12, %c0_13, %c0_14], %16 {strides = array<i32>} : memref<1x1x256xf32, #tpu.memory_space<vmem>>, vector<1x1x256xf32>,
    return
  }
  func.func @transform_0(%arg0: i32, %arg1: i32) -> (i32, i32, i32) {
    %c0_i32 = arith.constant 0 : i32
    %c0_i32_0 = arith.constant 0 : i32
    return %arg0, %c0_i32, %arg1 : i32, i32, i32
  }
  func.func @transform_1(%arg0: i32, %arg1: i32) -> (i32, i32) {
    %c0_i32 = arith.constant 0 : i32
    %c0_i32_0 = arith.constant 0 : i32
    %c0_i32_1 = arith.constant 0 : i32
    return %c0_i32, %c0_i32_0 : i32, i32
  }
  func.func @transform_2(%arg0: i32, %arg1: i32) -> (i32, i32) {
    %c0_i32 = arith.constant 0 : i32
    %c0_i32_0 = arith.constant 0 : i32
    %c0_i32_1 = arith.constant 0 : i32
    return %c0_i32, %c0_i32_0 : i32, i32
  }
  func.func @transform_3(%arg0: i32, %arg1: i32) -> (i32, i32) {
    %c0_i32 = arith.constant 0 : i32
    %c0_i32_0 = arith.constant 0 : i32
    %c0_i32_1 = arith.constant 0 : i32
    return %c0_i32, %c0_i32_0 : i32, i32
  }
  func.func @transform_4(%arg0: i32, %arg1: i32) -> (i32, i32) {
    %c0_i32 = arith.constant 0 : i32
    %c0_i32_0 = arith.constant 0 : i32
    %c0_i32_1 = arith.constant 0 : i32
    return %c0_i32, %c0_i32_0 : i32, i32
  }
  func.func @transform_5(%arg0: i32, %arg1: i32) -> (i32, i32, i32) {
    %c0_i32 = arith.constant 0 : i32
    %c0_i32_0 = arith.constant 0 : i32
    return %arg0, %c0_i32, %arg1 : i32, i32, i32
  }
}

</mosaic_0001>

<llo_original>
// kernel: tpu_custom_call.1
$region0: #{tpu_custom_call.1}
  #allocation0 [shape = 'u32[]', space=smem, size = 0x4, offset = 0x4, fixed_abs, tag = 'smem constant byte address 0x4 - core index']
  #allocation1 [shape = 'u32[144,128]{1,0:T(1,128)}', space=vmem, size = 0x12000, scoped, tag = 'internal scratch']
  #allocation2 [shape = 'f32[1,1]{1,0:T(1,128)S(1)}', space=vmem, size = 0x200, scoped, tag = 'scoped memory for tpu_custom_call.1']
  %s0 = inlined_call_operand.vmem [shape: f32[2,12,256], index: 0, kind: input, shape index: {}]
  %s1 = inlined_call_operand.vmem [shape: f32[32,12], index: 1, kind: input, shape index: {}]
  %s2 = inlined_call_operand.vmem [shape: f32[32,1], index: 2, kind: input, shape index: {}]
  %s3 = inlined_call_operand.vmem [shape: f32[1,32], index: 3, kind: input, shape index: {}]
  %s4 = inlined_call_operand.<no memory space> [shape: f32[1,1], index: 4, kind: input, shape index: {}]
  %s5 = inlined_call_operand.hbm [shape: f32[2,1,256], index: 5, kind: output, shape index: {}]
  %s6 = sld [smem:[#allocation0]]
  $region53: #{tpu_custom_call.1} parent=0
    _
  %s8 = ssub.s32 1, %s6
  %s9 = scalar_select 0, %s8, %s6
  %v10 = vstv %s4
  %11 = vst [vmem:[#allocation2] sm:$0x1] %v10
  $region1: #{tpu_custom_call.1} parent=0
    #allocation3 [shape = 'u8[2048]{0}', space=vmem, size = 0x800, scoped, tag = 'output window, operand 0']
    #allocation4 [shape = 's32[2]{0}', space=sflag, size = 0x8, scoped, tag = 'scoped memory for tpu_custom_call.1']
    %12 = vsyncpa [#allocation4], 0
    %s13 = scalar_lea.sflag [#allocation4], 1
    %14 = vsyncpa %s13, 0
    loop: start=0, step=1, limit=4
    $region2: #{tpu_custom_call.1} parent=1 // loop_pre_header
      _
    $region3: #{tpu_custom_call.1} parent=1 // loop_header
      %s16 = sphi 0, %s20
      %p17 = scmp.ge.s32.totalorder %s16, 4
      %s23 = sphi 0, %s35
      %s24 = sphi 0, %s31
      %s25 = sphi 0, %s23
      %s26 = sphi 0, %s24
      %s27 = sphi 0, %s25
      %s28 = sphi 0, %s26
      %s40 = sphi 0, %s42
      %s43 = sphi 0, %s40
      %s44 = sphi 0, %s43
      %s60 = sphi 0, %s44
      %s64 = sphi 0, %s64
      %s66 = sphi 0, %s64
      %s67 = sphi 0, %s66
      %s81 = sphi 0, %s67
      %s85 = sphi 0, %s85
      %s87 = sphi 0, %s85
      %s88 = sphi 0, %s87
      %s102 = sphi 0, %s88
      %s106 = sphi 0, %s106
      %s108 = sphi 0, %s106
      %s109 = sphi 0, %s108
      %s123 = sphi 0, %s109
      %s127 = sphi 0, %s127
      %s129 = sphi 0, %s127
      %s130 = sphi 0, %s129
      %s144 = sphi 0, %s130
      %s152 = sphi 0, %s154
      %s155 = sphi 0, %s152
      %s156 = sphi 0, %s155
      %s172 = sphi 0, %s156
    $region4: #{tpu_custom_call.1} parent=1 // loop_header_branch
      %19 = sbr.rel (%p17) target = $region8
    $region5: #{tpu_custom_call.1} parent=1 // loop_body
      %s21 = ssub.s32 %s16, 1
      %s22 = ssub.s32 %s16, 2
      %s29 = sadd.s32 1, %s24
      %p30 = scmp.ge.s32.totalorder %s29, 1
      %s31 = scalar_select %p30, 0, %s29
      %s32 = sadd.s32 1, %s23
      %s33 = scalar_select %p30, %s32, %s23
      %p34 = scmp.ge.s32.totalorder %s33, 2
      %s35 = scalar_select %p34, 0, %s33
      %s36 = ssub.s32 %s23, %s35
      %s37 = ssub.s32 %s24, %s31
      %s38 = sor.u32 %s36, %s37
      %p39 = scmp.eq.s32.totalorder %s38, 0
      %s41 = sadd.s32 %s40, 1
      %s42 = scalar_select %p39, %s40, %s41
      %p45 = pneg %p39
      %p46 = scmp.eq.s32.totalorder %s16, 1
      %p47 = por %p45, %p46
      %p48 = scmp.ne.s32.totalorder %s40, %s43
      %p49 = scmp.eq.s32.totalorder %s16, 0
      %p50 = por %p48, %p49
      %p51 = scmp.ne.s32.totalorder %s40, %s43
      %p52 = scmp.eq.s32.totalorder %s21, 1
      %p53 = por %p51, %p52
      %p54 = scmp.ne.s32.totalorder %s43, %s44
      %p55 = scmp.eq.s32.totalorder %s21, 0
      %p56 = por %p54, %p55
      %p57 = scmp.ne.s32.totalorder %s43, %s44
      %p58 = scmp.eq.s32.totalorder %s22, 1
      %p59 = por %p57, %p58
      %p61 = scmp.ne.s32.totalorder %s44, %s60
      %p62 = scmp.eq.s32.totalorder %s22, 0
      %p63 = por %p61, %p62
      %s65 = sadd.s32 %s64, 1
      %p68 = scmp.eq.s32.totalorder %s16, 1
      %p69 = scmp.ne.s32.totalorder %s64, %s66
      %p70 = scmp.eq.s32.totalorder %s16, 0
      %p71 = por %p69, %p70
      %p72 = scmp.ne.s32.totalorder %s64, %s66
      %p73 = scmp.eq.s32.totalorder %s21, 1
      %p74 = por %p72, %p73
      %p75 = scmp.ne.s32.totalorder %s66, %s67
      %p76 = scmp.eq.s32.totalorder %s21, 0
      %p77 = por %p75, %p76
      %p78 = scmp.ne.s32.totalorder %s66, %s67
      %p79 = scmp.eq.s32.totalorder %s22, 1
      %p80 = por %p78, %p79
      %p82 = scmp.ne.s32.totalorder %s67, %s81
      %p83 = scmp.eq.s32.totalorder %s22, 0
      %p84 = por %p82, %p83
      %s86 = sadd.s32 %s85, 1
      %p89 = scmp.eq.s32.totalorder %s16, 1
      %p90 = scmp.ne.s32.totalorder %s85, %s87
      %p91 = scmp.eq.s32.totalorder %s16, 0
      %p92 = por %p90, %p91
      %p93 = scmp.ne.s32.totalorder %s85, %s87
      %p94 = scmp.eq.s32.totalorder %s21, 1
      %p95 = por %p93, %p94
      %p96 = scmp.ne.s32.totalorder %s87, %s88
      %p97 = scmp.eq.s32.totalorder %s21, 0
      %p98 = por %p96, %p97
      %p99 = scmp.ne.s32.totalorder %s87, %s88
      %p100 = scmp.eq.s32.totalorder %s22, 1
      %p101 = por %p99, %p100
      %p103 = scmp.ne.s32.totalorder %s88, %s102
      %p104 = scmp.eq.s32.totalorder %s22, 0
      %p105 = por %p103, %p104
      %s107 = sadd.s32 %s106, 1
      %p110 = scmp.eq.s32.totalorder %s16, 1
      %p111 = scmp.ne.s32.totalorder %s106, %s108
      %p112 = scmp.eq.s32.totalorder %s16, 0
      %p113 = por %p111, %p112
      %p114 = scmp.ne.s32.totalorder %s106, %s108
      %p115 = scmp.eq.s32.totalorder %s21, 1
      %p116 = por %p114, %p115
      %p117 = scmp.ne.s32.totalorder %s108, %s109
      %p118 = scmp.eq.s32.totalorder %s21, 0
      %p119 = por %p117, %p118
      %p120 = scmp.ne.s32.totalorder %s108, %s109
      %p121 = scmp.eq.s32.totalorder %s22, 1
      %p122 = por %p120, %p121
      %p124 = scmp.ne.s32.totalorder %s109, %s123
      %p125 = scmp.eq.s32.totalorder %s22, 0
      %p126 = por %p124, %p125
      %s128 = sadd.s32 %s127, 1
      %p131 = scmp.eq.s32.totalorder %s16, 1
      %p132 = scmp.ne.s32.totalorder %s127, %s129
      %p133 = scmp.eq.s32.totalorder %s16, 0
      %p134 = por %p132, %p133
      %p135 = scmp.ne.s32.totalorder %s127, %s129
      %p136 = scmp.eq.s32.totalorder %s21, 1
      %p137 = por %p135, %p136
      %p138 = scmp.ne.s32.totalorder %s129, %s130
      %p139 = scmp.eq.s32.totalorder %s21, 0
      %p140 = por %p138, %p139
      %p141 = scmp.ne.s32.totalorder %s129, %s130
      %p142 = scmp.eq.s32.totalorder %s22, 1
      %p143 = por %p141, %p142
      %p145 = scmp.ne.s32.totalorder %s130, %s144
      %p146 = scmp.eq.s32.totalorder %s22, 0
      %p147 = por %p145, %p146
      %s148 = ssub.s32 %s23, %s35
      %s149 = ssub.s32 %s24, %s31
      %s150 = sor.u32 %s148, %s149
      %p151 = scmp.eq.s32.totalorder %s150, 0
      %s153 = sadd.s32 %s152, 1
      %s154 = scalar_select %p151, %s152, %s153
      %p157 = pneg %p151
      %p158 = scmp.eq.s32.totalorder %s16, 1
      %p159 = por %p157, %p158
      %p160 = scmp.ne.s32.totalorder %s152, %s155
      %p161 = scmp.eq.s32.totalorder %s16, 0
      %p162 = por %p160, %p161
      %p163 = scmp.ne.s32.totalorder %s152, %s155
      %p164 = scmp.eq.s32.totalorder %s21, 1
      %p165 = por %p163, %p164
      %p166 = scmp.ne.s32.totalorder %s155, %s156
      %p167 = scmp.eq.s32.totalorder %s21, 0
      %p168 = por %p166, %p167
      %p169 = scmp.ne.s32.totalorder %s155, %s156
      %p170 = scmp.eq.s32.totalorder %s22, 1
      %p171 = por %p169, %p170
      %p173 = scmp.ne.s32.totalorder %s156, %s172
      %p174 = scmp.eq.s32.totalorder %s22, 0
      %p175 = por %p173, %p174
      %p176 = scmp.le.s32.totalorder 1, %s16
      %p177 = scmp.lt.s32.totalorder %s16, 3
      %p178 = pnand %p176, %p177
      %p179 = pneg %p178
      // Predicated region
      $region9: #{tpu_custom_call.1} parent=5 // pred_check
        _
      $region10: #{tpu_custom_call.1} parent=5 // pred_check_branch
        %181 = sbr.rel (%p178) target = $region12
      $region11: #{tpu_custom_call.1} parent=5 // pred_region
        %s182 = ssub.s32 %s16, 1
        // Predicated region
        $region13: #{tpu_custom_call.1} parent=11 // pred_check
          %p183 = pneg %p77
        $region14: #{tpu_custom_call.1} parent=11 // pred_check_branch
          %185 = sbr.rel (%p183) target = $region16
        $region15: #{tpu_custom_call.1} parent=11 // pred_region
          _
        $region16: #{tpu_custom_call.1} parent=11 // pred_fallthru
          _
        // Predicated region
        $region17: #{tpu_custom_call.1} parent=11 // pred_check
          %p186 = pneg %p98
        $region18: #{tpu_custom_call.1} parent=11 // pred_check_branch
          %188 = sbr.rel (%p186) target = $region20
        $region19: #{tpu_custom_call.1} parent=11 // pred_region
          _
        $region20: #{tpu_custom_call.1} parent=11 // pred_fallthru
          _
        // Predicated region
        $region21: #{tpu_custom_call.1} parent=11 // pred_check
          %p189 = pneg %p119
        $region22: #{tpu_custom_call.1} parent=11 // pred_check_branch
          %191 = sbr.rel (%p189) target = $region24
        $region23: #{tpu_custom_call.1} parent=11 // pred_region
          _
        $region24: #{tpu_custom_call.1} parent=11 // pred_fallthru
          _
        // Predicated region
        $region25: #{tpu_custom_call.1} parent=11 // pred_check
          %p192 = pneg %p140
        $region26: #{tpu_custom_call.1} parent=11 // pred_check_branch
          %194 = sbr.rel (%p192) target = $region28
        $region27: #{tpu_custom_call.1} parent=11 // pred_region
          _
        $region28: #{tpu_custom_call.1} parent=11 // pred_fallthru
          _
      $region12: #{tpu_custom_call.1} parent=5 // pred_fallthru
        _
      %p195 = scmp.lt.s32.totalorder %s16, 2
      // Predicated region
      $region29: #{tpu_custom_call.1} parent=5 // pred_check
        %p196 = pneg %p195
      $region30: #{tpu_custom_call.1} parent=5 // pred_check_branch
        %198 = sbr.rel (%p196) target = $region32
      $region31: #{tpu_custom_call.1} parent=5 // pred_region
        // Predicated region
        $region33: #{tpu_custom_call.1} parent=31 // pred_check
          %p199 = pneg %p50
        $region34: #{tpu_custom_call.1} parent=31 // pred_check_branch
          %201 = sbr.rel (%p199) target = $region36
        $region35: #{tpu_custom_call.1} parent=31 // pred_region
          %s202 = smul.u32 2, %s24
          %p203 = scmp.lt.s32.totalorder %s23, 1
          %s204 = scalar_select %p203, %s23, 1
          %p205 = scmp.lt.s32.totalorder %s202, 1
          %s206 = scalar_select %p205, %s202, 1
          %s207 = smul.addr %s204, 4
          %s208 = sadd.s32 %s206, %s207
          %s209 = smul.addr %s208, 8
          %s210 = scalar_lea.vmem %s0, %s209
          %s211 = smul.u32 2, %s24
        $region36: #{tpu_custom_call.1} parent=31 // pred_fallthru
          _
      $region32: #{tpu_custom_call.1} parent=5 // pred_fallthru
        _
      %p212 = scmp.le.s32.totalorder 1, %s16
      %p213 = scmp.lt.s32.totalorder %s16, 3
      %p214 = pnand %p212, %p213
      %p215 = pneg %p214
      // Predicated region
      $region37: #{tpu_custom_call.1} parent=5 // pred_check
        _
      $region38: #{tpu_custom_call.1} parent=5 // pred_check_branch
        %217 = sbr.rel (%p214) target = $region40
      $region39: #{tpu_custom_call.1} parent=5 // pred_region
        %s218 = ssub.s32 %s16, 1
        %s219 = smul.u32 2, %s26
        %p220 = scmp.lt.s32.totalorder %s25, 1
        %s221 = scalar_select %p220, %s25, 1
        %p222 = scmp.lt.s32.totalorder %s219, 1
        %s223 = scalar_select %p222, %s219, 1
        %s224 = smul.addr %s221, 4
        %s225 = sadd.s32 %s223, %s224
        %s226 = smul.addr %s225, 8
        %s227 = scalar_lea.vmem %s0, %s226
        %p228 = pneg %p56
        %p229 = pneg %p53
        %p230 = pneg %p77
        %p231 = pneg %p74
        %p232 = pneg %p98
        %p233 = pneg %p95
        %p234 = pneg %p119
        %p235 = pneg %p116
        %p236 = pneg %p140
        %p237 = pneg %p137
        %p238 = pneg %p168
        %p239 = pneg %p165
        %s240 = sand.u32 %s155, 1
        %s241 = scalar_lea.sflag [#allocation4], %s240
        %s242 = sand.u32 %s155, 1
        %s243 = smul.addr %s242, 2
        %s244 = scalar_lea.vmem [#allocation3], %s243
        %s245 = smul.u32 2, %s26
        %p246 = scmp.lt.s32.totalorder %s25, 1
        %s247 = scalar_select %p246, %s25, 1
        %p248 = scmp.lt.s32.totalorder %s245, 1
        %s249 = scalar_select %p248, %s245, 1
        %s250 = smul.addr %s247, 4
        %s251 = sadd.s32 %s249, %s250
        %s252 = smul.addr %s251, 8
        %s253 = scalar_lea.vmem %s0, %s252
        %s254 = smul.u32 2, %s26
        %s255 = smul.u32 2, %s26
        %v256 = vld [vmem:[%s1] sm:$0xff]
        %v257 = vld [vmem:[%s1 + $0x8] sm:$0xff]
        %v258 = vld [vmem:[%s1 + $0x10] sm:$0xff]
        %v259 = vld [vmem:[%s1 + $0x18] sm:$0xff]
        %v260 = vld [vmem:[%s2] sm:$0xff]
        %v261 = vld [vmem:[%s2 + $0x8] sm:$0xff]
        %v262 = vld [vmem:[%s2 + $0x10] sm:$0xff]
        %v263 = vld [vmem:[%s2 + $0x18] sm:$0xff]
        %v264 = vld [vmem:[%s3] sm:$0x1]
        %v265 = vld [vmem:[#allocation2] sm:$0x1]
        %v266 = vld [vmem:[%s253] sm:$0xff]
        %v267 = vld [vmem:[%s253 + $0x8] sm:$0xff]
        %v268 = vld [vmem:[%s253 + $0x10] sm:$0xf]
        %v269 = vld [vmem:[%s253 + $0x18] sm:$0xf]
        %271 = vset.pattern.permute.xlu0 0
        %272 = vperm.xlu0 %271, %v260
        %v273 = vpop.permute.xlu0 %272
        %276 = vset.pattern.permute.xlu0 0
        %277 = vperm.xlu0 %276, %v261
        %v278 = vpop.permute.xlu0 %277
        %281 = vset.pattern.permute.xlu0 0
        %282 = vperm.xlu0 %281, %v262
        %v283 = vpop.permute.xlu0 %282
        %286 = vset.pattern.permute.xlu0 0
        %287 = vperm.xlu0 %286, %v263
        %v288 = vpop.permute.xlu0 %287
        %vm290 = vcmask 97280
        %v292 = vsel %vm290, %v256, 0
        %v295 = vsel %vm290, %v257, 0
        %v298 = vsel %vm290, %v258, 0
        %v301 = vsel %vm290, %v259, 0
        %vm303 = vcmask 1043456
        %v305 = vsel %vm303, %v268, 0
        %v308 = vsel %vm303, %v269, 0
        %310 = vmatprep.subr.mxu0 0.0
        %311 = vmatpush1.msra.mxu0 0.0
        %312 = vmatprep.subr.mxu0 0.0
        %313 = vmatpush1.msra.mxu0 0.0
        %314 = vmatprep.subr.mxu0 0.0
        %315 = vmatpush1.msra.mxu0 0.0
        %316 = vmatprep.subr.mxu0 0.0
        %317 = vmatpush1.msra.mxu0 0.0
        %318 = vmatprep.subr.mxu0 0.0
        %319 = vmatpush1.msra.mxu0 0.0
        %320 = vmatprep.subr.mxu0 0.0
        %321 = vmatpush1.msra.mxu0 0.0
        %322 = vmatprep.subr.mxu0 0.0
        %323 = vmatpush1.msra.mxu0 0.0
        %324 = vmatprep.subr.mxu0 0.0
        %325 = vmatpush1.msra.mxu0 0.0
        %326 = vmatprep.subr.mxu0 0.0
        %327 = vmatpush1.msra.mxu0 0.0
        %328 = vmatprep.subr.mxu0 0.0
        %329 = vmatpush1.msra.mxu0 0.0
        %330 = vmatprep.subr.mxu0 0.0
        %331 = vmatpush1.msra.mxu0 0.0
        %332 = vmatprep.subr.mxu0 0.0
        %333 = vmatpush1.msra.mxu0 0.0
        %334 = vmatprep.subr.mxu0 0.0
        %335 = vmatpush1.msra.mxu0 0.0
        %336 = vmatprep.subr.mxu0 0.0
        %337 = vmatpush1.msra.mxu0 0.0
        %338 = vmatprep.subr.mxu0 %v308
        %339 = vmatpush1.msra.mxu0 %v305
        %340 = vmatprep.subr.mxu0 %v267
        %341 = vmatpush1.msra.mxu0 %v266
        %342 = vmatprep.subr.mxu0 0.0
        %343 = vmatpush2.msra.mxu0 0.0
        %344 = vmatprep.subr.mxu0 0.0
        %345 = vmatpush2.msra.mxu0 0.0
        %346 = vmatprep.subr.mxu0 0.0
        %347 = vmatpush2.msra.mxu0 0.0
        %348 = vmatprep.subr.mxu0 0.0
        %349 = vmatpush2.msra.mxu0 0.0
        %350 = vmatprep.subr.mxu0 0.0
        %351 = vmatpush2.msra.mxu0 0.0
        %352 = vmatprep.subr.mxu0 0.0
        %353 = vmatpush2.msra.mxu0 0.0
        %354 = vmatprep.subr.mxu0 0.0
        %355 = vmatpush2.msra.mxu0 0.0
        %356 = vmatprep.subr.mxu0 0.0
        %357 = vmatpush2.msra.mxu0 0.0
        %358 = vmatprep.subr.mxu0 0.0
        %359 = vmatpush2.msra.mxu0 0.0
        %360 = vmatprep.subr.mxu0 0.0
        %361 = vmatpush2.msra.mxu0 0.0
        %362 = vmatprep.subr.mxu0 0.0
        %363 = vmatpush2.msra.mxu0 0.0
        %364 = vmatprep.subr.mxu0 0.0
        %365 = vmatpush2.msra.mxu0 0.0
        %366 = vmatprep.subr.mxu0 0.0
        %367 = vmatpush2.msra.mxu0 0.0
        %368 = vmatprep.subr.mxu0 0.0
        %369 = vmatpush2.msra.mxu0 0.0
        %370 = vmatprep.subr.mxu0 0.0
        %371 = vmatpush2.msra.mxu0 0.0
        %372 = vmatprep.subr.mxu0 0.0
        %373 = vmatpush2.msra.mxu0 0.0
        %374 = vmatprep.mubr.f32.mxu0 0.0
        %375 = vmatmul.mubr.f32.gmra.mxu0 %v292
        %v376 = vpop.f32.mrf.mxu0
        %v377 = vadd.f32 %v273, %v376
        %v378 = vpop.f32.mrf.mxu0
        %v379 = vadd.f32 %v273, %v378
        %380 = vmatprep.mubr.f32.mxu0 0.0
        %381 = vmatmul.mubr.f32.gmra.mxu0 %v295
        %v382 = vpop.f32.mrf.mxu0
        %v383 = vadd.f32 %v278, %v382
        %v384 = vpop.f32.mrf.mxu0
        %v385 = vadd.f32 %v278, %v384
        %386 = vmatprep.mubr.f32.mxu0 0.0
        %387 = vmatmul.mubr.f32.gmra.mxu0 %v298
        %v388 = vpop.f32.mrf.mxu0
        %v389 = vadd.f32 %v283, %v388
        %v390 = vpop.f32.mrf.mxu0
        %v391 = vadd.f32 %v283, %v390
        %392 = vmatprep.mubr.f32.mxu0 0.0
        %393 = vmatmul.mubr.f32.gmra.mxu0 %v301
        %v394 = vpop.f32.mrf.mxu0
        %v395 = vadd.f32 %v288, %v394
        %v396 = vpop.f32.mrf.mxu0
        %v397 = vadd.f32 %v288, %v396
        %398 = vdwg.mxu0
        %v399 = vmax.f32 %v377, 0.0
        %v400 = vmax.f32 %v379, 0.0
        %v401 = vmax.f32 %v383, 0.0
        %v402 = vmax.f32 %v385, 0.0
        %v403 = vmax.f32 %v389, 0.0
        %v404 = vmax.f32 %v391, 0.0
        %v405 = vmax.f32 %v395, 0.0
        %v406 = vmax.f32 %v397, 0.0
        %408 = vset.pattern.permute.xlu0 0
        %409 = vperm.xlu0 %408, %v265
        %v410 = vpop.permute.xlu0 %409
        %v412 = vlaneseq
        %v413 = vshrl.u32 %v412, 7
        %v414 = vsub.s32 0, %v413
        %v415 = vrot.slane %v410, %v414
        %vm416 = vcmask 261120
        %v418 = vsel %vm416, %v264, 0
        %420 = vmatprep.subr.mxu0 0.0
        %421 = vmatpush1.msra.mxu0 0.0
        %422 = vmatprep.subr.mxu0 0.0
        %423 = vmatpush1.msra.mxu0 0.0
        %424 = vmatprep.subr.mxu0 0.0
        %425 = vmatpush1.msra.mxu0 0.0
        %426 = vmatprep.subr.mxu0 0.0
        %427 = vmatpush1.msra.mxu0 0.0
        %428 = vmatprep.subr.mxu0 0.0
        %429 = vmatpush1.msra.mxu0 0.0
        %430 = vmatprep.subr.mxu0 0.0
        %431 = vmatpush1.msra.mxu0 0.0
        %432 = vmatprep.subr.mxu0 0.0
        %433 = vmatpush1.msra.mxu0 0.0
        %434 = vmatprep.subr.mxu0 0.0
        %435 = vmatpush1.msra.mxu0 0.0
        %436 = vmatprep.subr.mxu0 0.0
        %437 = vmatpush1.msra.mxu0 0.0
        %438 = vmatprep.subr.mxu0 0.0
        %439 = vmatpush1.msra.mxu0 0.0
        %440 = vmatprep.subr.mxu0 0.0
        %441 = vmatpush1.msra.mxu0 0.0
        %442 = vmatprep.subr.mxu0 0.0
        %443 = vmatpush1.msra.mxu0 0.0
        %444 = vmatprep.subr.mxu0 %v406
        %445 = vmatpush1.msra.mxu0 %v405
        %446 = vmatprep.subr.mxu0 %v404
        %447 = vmatpush1.msra.mxu0 %v403
        %448 = vmatprep.subr.mxu0 %v402
        %449 = vmatpush1.msra.mxu0 %v401
        %450 = vmatprep.subr.mxu0 %v400
        %451 = vmatpush1.msra.mxu0 %v399
        %452 = vmatprep.subr.mxu0 0.0
        %453 = vmatpush2.msra.mxu0 0.0
        %454 = vmatprep.subr.mxu0 0.0
        %455 = vmatpush2.msra.mxu0 0.0
        %456 = vmatprep.subr.mxu0 0.0
        %457 = vmatpush2.msra.mxu0 0.0
        %458 = vmatprep.subr.mxu0 0.0
        %459 = vmatpush2.msra.mxu0 0.0
        %460 = vmatprep.subr.mxu0 0.0
        %461 = vmatpush2.msra.mxu0 0.0
        %462 = vmatprep.subr.mxu0 0.0
        %463 = vmatpush2.msra.mxu0 0.0
        %464 = vmatprep.subr.mxu0 0.0
        %465 = vmatpush2.msra.mxu0 0.0
        %466 = vmatprep.subr.mxu0 0.0
        %467 = vmatpush2.msra.mxu0 0.0
        %468 = vmatprep.subr.mxu0 0.0
        %469 = vmatpush2.msra.mxu0 0.0
        %470 = vmatprep.subr.mxu0 0.0
        %471 = vmatpush2.msra.mxu0 0.0
        %472 = vmatprep.subr.mxu0 0.0
        %473 = vmatpush2.msra.mxu0 0.0
        %474 = vmatprep.subr.mxu0 0.0
        %475 = vmatpush2.msra.mxu0 0.0
        %476 = vmatprep.subr.mxu0 0.0
        %477 = vmatpush2.msra.mxu0 0.0
        %478 = vmatprep.subr.mxu0 0.0
        %479 = vmatpush2.msra.mxu0 0.0
        %480 = vmatprep.subr.mxu0 0.0
        %481 = vmatpush2.msra.mxu0 0.0
        %482 = vmatprep.subr.mxu0 0.0
        %483 = vmatpush2.msra.mxu0 0.0
        %484 = vmatprep.mubr.f32.mxu0 0.0
        %485 = vmatmul.mubr.f32.gmra.mxu0 %v418
        %v486 = vpop.f32.mrf.mxu0
        %v487 = vadd.f32 %v415, %v486
        %v488 = vpop.f32.mrf.mxu0
        %v489 = vadd.f32 %v415, %v488
        %490 = vdwg.mxu0
        %v493 = vcombine.low %v487, %v489
        %v495 = vunpack.c.l.s4 1966171168
        %v496 = vunpack.c.0.s8 %v495
        %v497 = vlaneseq
        %v498 = vshrl.u32 %v497, 7
        %v499 = vsub.s32 %v496, %v498
        %v500 = vrot.slane %v493, %v499
        %v502 = vunpack.c.l.s4 1966171168
        %v503 = vunpack.c.0.s8 %v502
        %v504 = vlaneseq
        %v505 = vshrl.u32 %v504, 7
        %v506 = vsub.s32 %v503, %v505
        %v507 = vrot.slane %v500, %v506
        %v509 = vlaneseq
        %vm510 = vcmp.ge.s32.totalorder %v509, 0
        %vm511 = vcmp.lt.s32.totalorder %v509, 256
        %vm512 = vmand %vm510, %vm511
        %513 = vst.msk [vmem:[%s244] sm:$0x3] %vm512, %v507
        %s514 = sand.u32 %s155, 1
        %s515 = scalar_lea.sflag [#allocation4], %s514
        %s516 = sand.u32 %s155, 1
        %s517 = smul.addr %s516, 2
        %s518 = scalar_lea.vmem [#allocation3], %s517
        // Predicated region
        $region41: #{tpu_custom_call.1} parent=39 // pred_check
          %p519 = pneg %p165
        $region42: #{tpu_custom_call.1} parent=39 // pred_check_branch
          %521 = sbr.rel (%p519) target = $region44
        $region43: #{tpu_custom_call.1} parent=39 // pred_region
          %s522 = smul.u32 2, %s26
          %s524 = ssub.s32 32, 32
          %525 = vsyncadd %s515, %s524
          %s526 = smul.addr %s25, 2
          %s527 = sadd.s32 %s522, %s526
          %s528 = smul.addr %s527, 16
          %s529 = scalar_lea.hbm %s5, %s528
          %s531 = sshll.u32 %s518, 4
          %s532 = int_to_ptr.vmem [resolvable:$true] %s531
          %534 = dma.vmem_to_hbm [thread:$0]  %s532, 32, %s529, %s515
        $region44: #{tpu_custom_call.1} parent=39 // pred_fallthru
          _
      $region40: #{tpu_custom_call.1} parent=5 // pred_fallthru
        _
      %p535 = scmp.le.s32.totalorder 2, %s16
      // Predicated region
      $region45: #{tpu_custom_call.1} parent=5 // pred_check
        %p536 = pneg %p535
      $region46: #{tpu_custom_call.1} parent=5 // pred_check_branch
        %538 = sbr.rel (%p536) target = $region48
      $region47: #{tpu_custom_call.1} parent=5 // pred_region
        %s539 = ssub.s32 %s16, 2
        // Predicated region
        $region49: #{tpu_custom_call.1} parent=47 // pred_check
          %p540 = pneg %p171
        $region50: #{tpu_custom_call.1} parent=47 // pred_check_branch
          %542 = sbr.rel (%p540) target = $region52
        $region51: #{tpu_custom_call.1} parent=47 // pred_region
          %s543 = sand.u32 %s156, 1
          %s544 = scalar_lea.sflag [#allocation4], %s543
          %s545 = sand.u32 %s156, 1
          %s546 = smul.addr %s545, 2
          %s547 = scalar_lea.vmem [#allocation3], %s546
          %548 = dma.done %s544, 32
        $region52: #{tpu_custom_call.1} parent=47 // pred_fallthru
          _
      $region48: #{tpu_custom_call.1} parent=5 // pred_fallthru
        _
    $region6: #{tpu_custom_call.1} parent=1 // loop_footer
      %s20 = sadd.s32 1, %s16
    $region7: #{tpu_custom_call.1} parent=1 // loop_footer_branch
      %15 = sbr.rel target = $region3
    $region8: #{tpu_custom_call.1} parent=1 // loop_exit
      _
    %549 = vsyncpa [#allocation4], 1
    %s550 = scalar_lea.sflag [#allocation4], 1
    %551 = vsyncpa %s550, 1

</llo_original>
